<compile_context>
chip_gen: v5e
topology: v5e:2x2
jax: 0.10.0
libtpu: 0.0.40
codegen_flags: <defaults>
</compile_context>

<pallas_src>
import functools

import jax
import jax.numpy as jnp
from jax.experimental import pallas as pl
from jax.experimental.pallas import tpu as pltpu


def center_loss_kernel(labels_ref, x_ref, c_hbm, dist_ref, cbuf, sem, *, tb):
    # labels_ref: (B,)   int32  SMEM (scalar-prefetch)
    # x_ref:      (tb, D)       VMEM tile of features (auto-pipelined)
    # c_hbm:      (C, D)        centers, left in HBM (memory_space=pl.ANY)
    # dist_ref:   (tb, 1) f32   per-row clipped squared distance (output block)
    # cbuf:       (tb, D)       VMEM scratch holding the gathered center rows
    # sem:        (tb,)         DMA completion semaphores
    base = pl.program_id(0) * tb

    # Gather centers[labels[base + r]] for r in [0, tb): one small row DMA each,
    # all in flight before waiting on any of them.
    copies = []
    for r in range(tb):
        lbl = labels_ref[base + r]
        cp = pltpu.make_async_copy(c_hbm.at[lbl], cbuf.at[r], sem.at[r])
        cp.start()
        copies.append(cp)
    for cp in copies:
        cp.wait()

    x = x_ref[...].astype(jnp.float32)
    c = cbuf[...].astype(jnp.float32)
    diff = x - c
    dist = jnp.sum(diff * diff, axis=1, keepdims=True)      # (tb, 1) VPU/XLU only
    dist_ref[...] = jnp.clip(dist, 1e-10, 1e10)


def center_loss(x, centers, labels, *, tb=8):
    B, D = x.shape
    C, Dc = centers.shape
    assert D == Dc, (D, Dc)
    tb = min(tb, B)
    assert B % tb == 0, "batch must be divisible by the batch tile"
    num_tiles = B // tb
    labels = labels.astype(jnp.int32).reshape(B)

    grid_spec = pltpu.PrefetchScalarGridSpec(
        num_scalar_prefetch=1,                              # labels -> SMEM
        grid=(num_tiles,),
        in_specs=[
            pl.BlockSpec((tb, D), lambda i, lbl: (i, 0)),   # x tile, double-buffered
            pl.BlockSpec(memory_space=pl.ANY),              # centers stay in HBM
        ],
        out_specs=pl.BlockSpec((tb, 1), lambda i, lbl: (i, 0)),
        scratch_shapes=[
            pltpu.VMEM((tb, D), centers.dtype),             # gathered center rows
            pltpu.SemaphoreType.DMA((tb,)),
        ],
    )

    per_row = pl.pallas_call(
        functools.partial(center_loss_kernel, tb=tb),
        out_shape=jax.ShapeDtypeStruct((B, 1), jnp.float32),
        grid_spec=grid_spec,
        compiler_params=pltpu.CompilerParams(
            dimension_semantics=("parallel",),              # rows independent -> megacore
            vmem_limit_bytes=32 * 1024 * 1024,              # safe on v5e/v6e/v7x
        ),
    )(labels, x, centers)

    # Tiny finalize outside the kernel: mean over the batch.
    return jnp.mean(per_row)


def center_loss_ref(x, centers, labels):
    # Pure-JAX reference mirroring the PyTorch forward (distmat expansion).
    C = centers.shape[0]
    x = x.astype(jnp.float32)
    centers = centers.astype(jnp.float32)
    distmat = (
        jnp.sum(x**2, axis=1, keepdims=True)
        + jnp.sum(centers**2, axis=1)[None, :]
        - 2.0 * x @ centers.T
    )
    mask = labels[:, None] == jnp.arange(C)[None, :]
    dist = jnp.sum(jnp.where(mask, distmat, 0.0), axis=1)
    dist = jnp.clip(dist, 1e-10, 1e10)
    return jnp.mean(dist)


if __name__ == "__main__":
    num_classes = 16
    feat_dim = 128
    batch_size = 8

    key = jax.random.PRNGKey(0)
    k_x, k_c, k_l = jax.random.split(key, 3)

    # Deterministic synthetic "parameter" init for centers (module uses randn).
    centers = jax.random.normal(k_c, (num_classes, feat_dim), dtype=jnp.float32)
    x = jax.random.normal(k_x, (batch_size, feat_dim), dtype=jnp.float32)
    labels = jax.random.randint(k_l, (batch_size,), 0, num_classes, dtype=jnp.int32)

    loss = center_loss(x, centers, labels)
    jax.block_until_ready(loss)

    ref = center_loss_ref(x, centers, labels)
    assert jnp.allclose(loss, ref, rtol=1e-4, atol=1e-4), (loss, ref)

    print("KERNEL_OK")
</pallas_src>

<mosaic_0001>
module attributes {stable_mosaic.version = 11 : i64} {
  func.func @center_loss_kernel(%arg0: i32, %arg1: memref<8xi32, #tpu.memory_space<smem>>, %arg2: memref<8x128xf32, #tpu.memory_space<vmem>>, %arg3: memref<16x128xf32, #tpu.memory_space<any>>, %arg4: memref<8x1xf32, #tpu.memory_space<vmem>>, %arg5: memref<8x128xf32, #tpu.memory_space<vmem>>, %arg6: memref<8x!tpu.dma_semaphore, #tpu.memory_space<semaphore_mem>>) attributes {dimension_semantics = [#tpu.dimension_semantics<parallel>], iteration_bounds = array<i64: 1>, scalar_prefetch = 1 : i64, scratch_operands = 2 : i64, tpu.core_type = #tpu.core_type<tc>, window_params = [{transform_indices = @transform_0, window_bounds = array<i64: 8, 128>}, {}, {transform_indices = @transform_2, window_bounds = array<i64: 8, 1>}]} {
    %c8_i32 = arith.constant 8 : i32
    %0 = arith.muli %arg0, %c8_i32 : i32
    %c0_i32 = arith.constant 0 : i32
    %1 = arith.addi %0, %c0_i32 : i32
    %2 = arith.index_cast %1 : i32 to index
    %3 = memref.load %arg1[%2] : memref<8xi32, #tpu.memory_space<smem>>
    %c0_i32_0 = arith.constant 0 : i32
    %c0_i32_1 = arith.constant 0 : i32
    %c0_i32_2 = arith.constant 0 : i32
    %4 = tpu.memref_slice %arg3[%3, %c0_i32_2] : memref<16x128xf32, #tpu.memory_space<any>> -> memref<1x128xf32, #tpu.memory_space<any>>
    %5 = tpu.memref_squeeze %4 : memref<1x128xf32, #tpu.memory_space<any>> -> memref<128xf32, #tpu.memory_space<any>>
    %c0_i32_3 = arith.constant 0 : i32
    %6 = tpu.memref_slice %arg5[%c0_i32_0, %c0_i32_3] : memref<8x128xf32, #tpu.memory_space<vmem>> -> memref<1x128xf32, #tpu.memory_space<vmem>>
    %7 = tpu.memref_squeeze %6 : memref<1x128xf32, #tpu.memory_space<vmem>> -> memref<128xf32, #tpu.memory_space<vmem>>
    %8 = tpu.memref_slice %arg6[%c0_i32_1] : memref<8x!tpu.dma_semaphore, #tpu.memory_space<semaphore_mem>> -> memref<1x!tpu.dma_semaphore, #tpu.memory_space<semaphore_mem>>
    %9 = tpu.memref_squeeze %8 : memref<1x!tpu.dma_semaphore, #tpu.memory_space<semaphore_mem>> -> memref<!tpu.dma_semaphore, #tpu.memory_space<semaphore_mem>>
    tpu.enqueue_dma source(%5 : memref<128xf32, #tpu.memory_space<any>>) target(%7 : memref<128xf32, #tpu.memory_space<vmem>>) target_semaphore(%9 : memref<!tpu.dma_semaphore, #tpu.memory_space<semaphore_mem>>)
    %c1_i32 = arith.constant 1 : i32
    %10 = arith.addi %0, %c1_i32 : i32
    %11 = arith.index_cast %10 : i32 to index
    %12 = memref.load %arg1[%11] : memref<8xi32, #tpu.memory_space<smem>>
    %c1_i32_4 = arith.constant 1 : i32
    %c1_i32_5 = arith.constant 1 : i32
    %c0_i32_6 = arith.constant 0 : i32
    %13 = tpu.memref_slice %arg3[%12, %c0_i32_6] : memref<16x128xf32, #tpu.memory_space<any>> -> memref<1x128xf32, #tpu.memory_space<any>>
    %14 = tpu.memref_squeeze %13 : memref<1x128xf32, #tpu.memory_space<any>> -> memref<128xf32, #tpu.memory_space<any>>
    %c0_i32_7 = arith.constant 0 : i32
    %15 = tpu.memref_slice %arg5[%c1_i32_4, %c0_i32_7] : memref<8x128xf32, #tpu.memory_space<vmem>> -> memref<1x128xf32, #tpu.memory_space<vmem>>
    %16 = tpu.memref_squeeze %15 : memref<1x128xf32, #tpu.memory_space<vmem>> -> memref<128xf32, #tpu.memory_space<vmem>>
    %17 = tpu.memref_slice %arg6[%c1_i32_5] : memref<8x!tpu.dma_semaphore, #tpu.memory_space<semaphore_mem>> -> memref<1x!tpu.dma_semaphore, #tpu.memory_space<semaphore_mem>>
    %18 = tpu.memref_squeeze %17 : memref<1x!tpu.dma_semaphore, #tpu.memory_space<semaphore_mem>> -> memref<!tpu.dma_semaphore, #tpu.memory_space<semaphore_mem>>
    tpu.enqueue_dma source(%14 : memref<128xf32, #tpu.memory_space<any>>) target(%16 : memref<128xf32, #tpu.memory_space<vmem>>) target_semaphore(%18 : memref<!tpu.dma_semaphore, #tpu.memory_space<semaphore_mem>>)
    %c2_i32 = arith.constant 2 : i32
    %19 = arith.addi %0, %c2_i32 : i32
    %20 = arith.index_cast %19 : i32 to index
    %21 = memref.load %arg1[%20] : memref<8xi32, #tpu.memory_space<smem>>
    %c2_i32_8 = arith.constant 2 : i32
    %c2_i32_9 = arith.constant 2 : i32
    %c0_i32_10 = arith.constant 0 : i32
    %22 = tpu.memref_slice %arg3[%21, %c0_i32_10] : memref<16x128xf32, #tpu.memory_space<any>> -> memref<1x128xf32, #tpu.memory_space<any>>
    %23 = tpu.memref_squeeze %22 : memref<1x128xf32, #tpu.memory_space<any>> -> memref<128xf32, #tpu.memory_space<any>>
    %c0_i32_11 = arith.constant 0 : i32
    %24 = tpu.memref_slice %arg5[%c2_i32_8, %c0_i32_11] : memref<8x128xf32, #tpu.memory_space<vmem>> -> memref<1x128xf32, #tpu.memory_space<vmem>>
    %25 = tpu.memref_squeeze %24 : memref<1x128xf32, #tpu.memory_space<vmem>> -> memref<128xf32, #tpu.memory_space<vmem>>
    %26 = tpu.memref_slice %arg6[%c2_i32_9] : memref<8x!tpu.dma_semaphore, #tpu.memory_space<semaphore_mem>> -> memref<1x!tpu.dma_semaphore, #tpu.memory_space<semaphore_mem>>
    %27 = tpu.memref_squeeze %26 : memref<1x!tpu.dma_semaphore, #tpu.memory_space<semaphore_mem>> -> memref<!tpu.dma_semaphore, #tpu.memory_space<semaphore_mem>>
    tpu.enqueue_dma source(%23 : memref<128xf32, #tpu.memory_space<any>>) target(%25 : memref<128xf32, #tpu.memory_space<vmem>>) target_semaphore(%27 : memref<!tpu.dma_semaphore, #tpu.memory_space<semaphore_mem>>)
    %c3_i32 = arith.constant 3 : i32
    %28 = arith.addi %0, %c3_i32 : i32
    %29 = arith.index_cast %28 : i32 to index
    %30 = memref.load %arg1[%29] : memref<8xi32, #tpu.memory_space<smem>>
    %c3_i32_12 = arith.constant 3 : i32
    %c3_i32_13 = arith.constant 3 : i32
    %c0_i32_14 = arith.constant 0 : i32
    %31 = tpu.memref_slice %arg3[%30, %c0_i32_14] : memref<16x128xf32, #tpu.memory_space<any>> -> memref<1x128xf32, #tpu.memory_space<any>>
    %32 = tpu.memref_squeeze %31 : memref<1x128xf32, #tpu.memory_space<any>> -> memref<128xf32, #tpu.memory_space<any>>
    %c0_i32_15 = arith.constant 0 : i32
    %33 = tpu.memref_slice %arg5[%c3_i32_12, %c0_i32_15] : memref<8x128xf32, #tpu.memory_space<vmem>> -> memref<1x128xf32, #tpu.memory_space<vmem>>
    %34 = tpu.memref_squeeze %33 : memref<1x128xf32, #tpu.memory_space<vmem>> -> memref<128xf32, #tpu.memory_space<vmem>>
    %35 = tpu.memref_slice %arg6[%c3_i32_13] : memref<8x!tpu.dma_semaphore, #tpu.memory_space<semaphore_mem>> -> memref<1x!tpu.dma_semaphore, #tpu.memory_space<semaphore_mem>>
    %36 = tpu.memref_squeeze %35 : memref<1x!tpu.dma_semaphore, #tpu.memory_space<semaphore_mem>> -> memref<!tpu.dma_semaphore, #tpu.memory_space<semaphore_mem>>
    tpu.enqueue_dma source(%32 : memref<128xf32, #tpu.memory_space<any>>) target(%34 : memref<128xf32, #tpu.memory_space<vmem>>) target_semaphore(%36 : memref<!tpu.dma_semaphore, #tpu.memory_space<semaphore_mem>>)
    %c4_i32 = arith.constant 4 : i32
    %37 = arith.addi %0, %c4_i32 : i32
    %38 = arith.index_cast %37 : i32 to index
    %39 = memref.load %arg1[%38] : memref<8xi32, #tpu.memory_space<smem>>
    %c4_i32_16 = arith.constant 4 : i32
    %c4_i32_17 = arith.constant 4 : i32
    %c0_i32_18 = arith.constant 0 : i32
    %40 = tpu.memref_slice %arg3[%39, %c0_i32_18] : memref<16x128xf32, #tpu.memory_space<any>> -> memref<1x128xf32, #tpu.memory_space<any>>
    %41 = tpu.memref_squeeze %40 : memref<1x128xf32, #tpu.memory_space<any>> -> memref<128xf32, #tpu.memory_space<any>>
    %c0_i32_19 = arith.constant 0 : i32
    %42 = tpu.memref_slice %arg5[%c4_i32_16, %c0_i32_19] : memref<8x128xf32, #tpu.memory_space<vmem>> -> memref<1x128xf32, #tpu.memory_space<vmem>>
    %43 = tpu.memref_squeeze %42 : memref<1x128xf32, #tpu.memory_space<vmem>> -> memref<128xf32, #tpu.memory_space<vmem>>
    %44 = tpu.memref_slice %arg6[%c4_i32_17] : memref<8x!tpu.dma_semaphore, #tpu.memory_space<semaphore_mem>> -> memref<1x!tpu.dma_semaphore, #tpu.memory_space<semaphore_mem>>
    %45 = tpu.memref_squeeze %44 : memref<1x!tpu.dma_semaphore, #tpu.memory_space<semaphore_mem>> -> memref<!tpu.dma_semaphore, #tpu.memory_space<semaphore_mem>>
    tpu.enqueue_dma source(%41 : memref<128xf32, #tpu.memory_space<any>>) target(%43 : memref<128xf32, #tpu.memory_space<vmem>>) target_semaphore(%45 : memref<!tpu.dma_semaphore, #tpu.memory_space<semaphore_mem>>)
    %c5_i32 = arith.constant 5 : i32
    %46 = arith.addi %0, %c5_i32 : i32
    %47 = arith.index_cast %46 : i32 to index
    %48 = memref.load %arg1[%47] : memref<8xi32, #tpu.memory_space<smem>>
    %c5_i32_20 = arith.constant 5 : i32
    %c5_i32_21 = arith.constant 5 : i32
    %c0_i32_22 = arith.constant 0 : i32
    %49 = tpu.memref_slice %arg3[%48, %c0_i32_22] : memref<16x128xf32, #tpu.memory_space<any>> -> memref<1x128xf32, #tpu.memory_space<any>>
    %50 = tpu.memref_squeeze %49 : memref<1x128xf32, #tpu.memory_space<any>> -> memref<128xf32, #tpu.memory_space<any>>
    %c0_i32_23 = arith.constant 0 : i32
    %51 = tpu.memref_slice %arg5[%c5_i32_20, %c0_i32_23] : memref<8x128xf32, #tpu.memory_space<vmem>> -> memref<1x128xf32, #tpu.memory_space<vmem>>
    %52 = tpu.memref_squeeze %51 : memref<1x128xf32, #tpu.memory_space<vmem>> -> memref<128xf32, #tpu.memory_space<vmem>>
    %53 = tpu.memref_slice %arg6[%c5_i32_21] : memref<8x!tpu.dma_semaphore, #tpu.memory_space<semaphore_mem>> -> memref<1x!tpu.dma_semaphore, #tpu.memory_space<semaphore_mem>>
    %54 = tpu.memref_squeeze %53 : memref<1x!tpu.dma_semaphore, #tpu.memory_space<semaphore_mem>> -> memref<!tpu.dma_semaphore, #tpu.memory_space<semaphore_mem>>
    tpu.enqueue_dma source(%50 : memref<128xf32, #tpu.memory_space<any>>) target(%52 : memref<128xf32, #tpu.memory_space<vmem>>) target_semaphore(%54 : memref<!tpu.dma_semaphore, #tpu.memory_space<semaphore_mem>>)
    %c6_i32 = arith.constant 6 : i32
    %55 = arith.addi %0, %c6_i32 : i32
    %56 = arith.index_cast %55 : i32 to index
    %57 = memref.load %arg1[%56] : memref<8xi32, #tpu.memory_space<smem>>
    %c6_i32_24 = arith.constant 6 : i32
    %c6_i32_25 = arith.constant 6 : i32
    %c0_i32_26 = arith.constant 0 : i32
    %58 = tpu.memref_slice %arg3[%57, %c0_i32_26] : memref<16x128xf32, #tpu.memory_space<any>> -> memref<1x128xf32, #tpu.memory_space<any>>
    %59 = tpu.memref_squeeze %58 : memref<1x128xf32, #tpu.memory_space<any>> -> memref<128xf32, #tpu.memory_space<any>>
    %c0_i32_27 = arith.constant 0 : i32
    %60 = tpu.memref_slice %arg5[%c6_i32_24, %c0_i32_27] : memref<8x128xf32, #tpu.memory_space<vmem>> -> memref<1x128xf32, #tpu.memory_space<vmem>>
    %61 = tpu.memref_squeeze %60 : memref<1x128xf32, #tpu.memory_space<vmem>> -> memref<128xf32, #tpu.memory_space<vmem>>
    %62 = tpu.memref_slice %arg6[%c6_i32_25] : memref<8x!tpu.dma_semaphore, #tpu.memory_space<semaphore_mem>> -> memref<1x!tpu.dma_semaphore, #tpu.memory_space<semaphore_mem>>
    %63 = tpu.memref_squeeze %62 : memref<1x!tpu.dma_semaphore, #tpu.memory_space<semaphore_mem>> -> memref<!tpu.dma_semaphore, #tpu.memory_space<semaphore_mem>>
    tpu.enqueue_dma source(%59 : memref<128xf32, #tpu.memory_space<any>>) target(%61 : memref<128xf32, #tpu.memory_space<vmem>>) target_semaphore(%63 : memref<!tpu.dma_semaphore, #tpu.memory_space<semaphore_mem>>)
    %c7_i32 = arith.constant 7 : i32
    %64 = arith.addi %0, %c7_i32 : i32
    %65 = arith.index_cast %64 : i32 to index
    %66 = memref.load %arg1[%65] : memref<8xi32, #tpu.memory_space<smem>>
    %c7_i32_28 = arith.constant 7 : i32
    %c7_i32_29 = arith.constant 7 : i32
    %c0_i32_30 = arith.constant 0 : i32
    %67 = tpu.memref_slice %arg3[%66, %c0_i32_30] : memref<16x128xf32, #tpu.memory_space<any>> -> memref<1x128xf32, #tpu.memory_space<any>>
    %68 = tpu.memref_squeeze %67 : memref<1x128xf32, #tpu.memory_space<any>> -> memref<128xf32, #tpu.memory_space<any>>
    %c0_i32_31 = arith.constant 0 : i32
    %69 = tpu.memref_slice %arg5[%c7_i32_28, %c0_i32_31] : memref<8x128xf32, #tpu.memory_space<vmem>> -> memref<1x128xf32, #tpu.memory_space<vmem>>
    %70 = tpu.memref_squeeze %69 : memref<1x128xf32, #tpu.memory_space<vmem>> -> memref<128xf32, #tpu.memory_space<vmem>>
    %71 = tpu.memref_slice %arg6[%c7_i32_29] : memref<8x!tpu.dma_semaphore, #tpu.memory_space<semaphore_mem>> -> memref<1x!tpu.dma_semaphore, #tpu.memory_space<semaphore_mem>>
    %72 = tpu.memref_squeeze %71 : memref<1x!tpu.dma_semaphore, #tpu.memory_space<semaphore_mem>> -> memref<!tpu.dma_semaphore, #tpu.memory_space<semaphore_mem>>
    tpu.enqueue_dma source(%68 : memref<128xf32, #tpu.memory_space<any>>) target(%70 : memref<128xf32, #tpu.memory_space<vmem>>) target_semaphore(%72 : memref<!tpu.dma_semaphore, #tpu.memory_space<semaphore_mem>>)
    %c0_i32_32 = arith.constant 0 : i32
    %c0_i32_33 = arith.constant 0 : i32
    %c0_i32_34 = arith.constant 0 : i32
    %73 = tpu.memref_slice %arg3[%3, %c0_i32_34] : memref<16x128xf32, #tpu.memory_space<any>> -> memref<1x128xf32, #tpu.memory_space<any>>
    %74 = tpu.memref_squeeze %73 : memref<1x128xf32, #tpu.memory_space<any>> -> memref<128xf32, #tpu.memory_space<any>>
    %c0_i32_35 = arith.constant 0 : i32
    %75 = tpu.memref_slice %arg5[%c0_i32_32, %c0_i32_35] : memref<8x128xf32, #tpu.memory_space<vmem>> -> memref<1x128xf32, #tpu.memory_space<vmem>>
    %76 = tpu.memref_squeeze %75 : memref<1x128xf32, #tpu.memory_space<vmem>> -> memref<128xf32, #tpu.memory_space<vmem>>
    %77 = tpu.memref_slice %arg6[%c0_i32_33] : memref<8x!tpu.dma_semaphore, #tpu.memory_space<semaphore_mem>> -> memref<1x!tpu.dma_semaphore, #tpu.memory_space<semaphore_mem>>
    %78 = tpu.memref_squeeze %77 : memref<1x!tpu.dma_semaphore, #tpu.memory_space<semaphore_mem>> -> memref<!tpu.dma_semaphore, #tpu.memory_space<semaphore_mem>>
    tpu.wait_dma2 semaphore(%78 : memref<!tpu.dma_semaphore, #tpu.memory_space<semaphore_mem>>) src(%74 : memref<128xf32, #tpu.memory_space<any>>) dst(%76 : memref<128xf32, #tpu.memory_space<vmem>>)
    %c1_i32_36 = arith.constant 1 : i32
    %c1_i32_37 = arith.constant 1 : i32
    %c0_i32_38 = arith.constant 0 : i32
    %79 = tpu.memref_slice %arg3[%12, %c0_i32_38] : memref<16x128xf32, #tpu.memory_space<any>> -> memref<1x128xf32, #tpu.memory_space<any>>
    %80 = tpu.memref_squeeze %79 : memref<1x128xf32, #tpu.memory_space<any>> -> memref<128xf32, #tpu.memory_space<any>>
    %c0_i32_39 = arith.constant 0 : i32
    %81 = tpu.memref_slice %arg5[%c1_i32_36, %c0_i32_39] : memref<8x128xf32, #tpu.memory_space<vmem>> -> memref<1x128xf32, #tpu.memory_space<vmem>>
    %82 = tpu.memref_squeeze %81 : memref<1x128xf32, #tpu.memory_space<vmem>> -> memref<128xf32, #tpu.memory_space<vmem>>
    %83 = tpu.memref_slice %arg6[%c1_i32_37] : memref<8x!tpu.dma_semaphore, #tpu.memory_space<semaphore_mem>> -> memref<1x!tpu.dma_semaphore, #tpu.memory_space<semaphore_mem>>
    %84 = tpu.memref_squeeze %83 : memref<1x!tpu.dma_semaphore, #tpu.memory_space<semaphore_mem>> -> memref<!tpu.dma_semaphore, #tpu.memory_space<semaphore_mem>>
    tpu.wait_dma2 semaphore(%84 : memref<!tpu.dma_semaphore, #tpu.memory_space<semaphore_mem>>) src(%80 : memref<128xf32, #tpu.memory_space<any>>) dst(%82 : memref<128xf32, #tpu.memory_space<vmem>>)
    %c2_i32_40 = arith.constant 2 : i32
    %c2_i32_41 = arith.constant 2 : i32
    %c0_i32_42 = arith.constant 0 : i32
    %85 = tpu.memref_slice %arg3[%21, %c0_i32_42] : memref<16x128xf32, #tpu.memory_space<any>> -> memref<1x128xf32, #tpu.memory_space<any>>
    %86 = tpu.memref_squeeze %85 : memref<1x128xf32, #tpu.memory_space<any>> -> memref<128xf32, #tpu.memory_space<any>>
    %c0_i32_43 = arith.constant 0 : i32
    %87 = tpu.memref_slice %arg5[%c2_i32_40, %c0_i32_43] : memref<8x128xf32, #tpu.memory_space<vmem>> -> memref<1x128xf32, #tpu.memory_space<vmem>>
    %88 = tpu.memref_squeeze %87 : memref<1x128xf32, #tpu.memory_space<vmem>> -> memref<128xf32, #tpu.memory_space<vmem>>
    %89 = tpu.memref_slice %arg6[%c2_i32_41] : memref<8x!tpu.dma_semaphore, #tpu.memory_space<semaphore_mem>> -> memref<1x!tpu.dma_semaphore, #tpu.memory_space<semaphore_mem>>
    %90 = tpu.memref_squeeze %89 : memref<1x!tpu.dma_semaphore, #tpu.memory_space<semaphore_mem>> -> memref<!tpu.dma_semaphore, #tpu.memory_space<semaphore_mem>>
    tpu.wait_dma2 semaphore(%90 : memref<!tpu.dma_semaphore, #tpu.memory_space<semaphore_mem>>) src(%86 : memref<128xf32, #tpu.memory_space<any>>) dst(%88 : memref<128xf32, #tpu.memory_space<vmem>>)
    %c3_i32_44 = arith.constant 3 : i32
    %c3_i32_45 = arith.constant 3 : i32
    %c0_i32_46 = arith.constant 0 : i32
    %91 = tpu.memref_slice %arg3[%30, %c0_i32_46] : memref<16x128xf32, #tpu.memory_space<any>> -> memref<1x128xf32, #tpu.memory_space<any>>
    %92 = tpu.memref_squeeze %91 : memref<1x128xf32, #tpu.memory_space<any>> -> memref<128xf32, #tpu.memory_space<any>>
    %c0_i32_47 = arith.constant 0 : i32
    %93 = tpu.memref_slice %arg5[%c3_i32_44, %c0_i32_47] : memref<8x128xf32, #tpu.memory_space<vmem>> -> memref<1x128xf32, #tpu.memory_space<vmem>>
    %94 = tpu.memref_squeeze %93 : memref<1x128xf32, #tpu.memory_space<vmem>> -> memref<128xf32, #tpu.memory_space<vmem>>
    %95 = tpu.memref_slice %arg6[%c3_i32_45] : memref<8x!tpu.dma_semaphore, #tpu.memory_space<semaphore_mem>> -> memref<1x!tpu.dma_semaphore, #tpu.memory_space<semaphore_mem>>
    %96 = tpu.memref_squeeze %95 : memref<1x!tpu.dma_semaphore, #tpu.memory_space<semaphore_mem>> -> memref<!tpu.dma_semaphore, #tpu.memory_space<semaphore_mem>>
    tpu.wait_dma2 semaphore(%96 : memref<!tpu.dma_semaphore, #tpu.memory_space<semaphore_mem>>) src(%92 : memref<128xf32, #tpu.memory_space<any>>) dst(%94 : memref<128xf32, #tpu.memory_space<vmem>>)
    %c4_i32_48 = arith.constant 4 : i32
    %c4_i32_49 = arith.constant 4 : i32
    %c0_i32_50 = arith.constant 0 : i32
    %97 = tpu.memref_slice %arg3[%39, %c0_i32_50] : memref<16x128xf32, #tpu.memory_space<any>> -> memref<1x128xf32, #tpu.memory_space<any>>
    %98 = tpu.memref_squeeze %97 : memref<1x128xf32, #tpu.memory_space<any>> -> memref<128xf32, #tpu.memory_space<any>>
    %c0_i32_51 = arith.constant 0 : i32
    %99 = tpu.memref_slice %arg5[%c4_i32_48, %c0_i32_51] : memref<8x128xf32, #tpu.memory_space<vmem>> -> memref<1x128xf32, #tpu.memory_space<vmem>>
    %100 = tpu.memref_squeeze %99 : memref<1x128xf32, #tpu.memory_space<vmem>> -> memref<128xf32, #tpu.memory_space<vmem>>
    %101 = tpu.memref_slice %arg6[%c4_i32_49] : memref<8x!tpu.dma_semaphore, #tpu.memory_space<semaphore_mem>> -> memref<1x!tpu.dma_semaphore, #tpu.memory_space<semaphore_mem>>
    %102 = tpu.memref_squeeze %101 : memref<1x!tpu.dma_semaphore, #tpu.memory_space<semaphore_mem>> -> memref<!tpu.dma_semaphore, #tpu.memory_space<semaphore_mem>>
    tpu.wait_dma2 semaphore(%102 : memref<!tpu.dma_semaphore, #tpu.memory_space<semaphore_mem>>) src(%98 : memref<128xf32, #tpu.memory_space<any>>) dst(%100 : memref<128xf32, #tpu.memory_space<vmem>>)
    %c5_i32_52 = arith.constant 5 : i32
    %c5_i32_53 = arith.constant 5 : i32
    %c0_i32_54 = arith.constant 0 : i32
    %103 = tpu.memref_slice %arg3[%48, %c0_i32_54] : memref<16x128xf32, #tpu.memory_space<any>> -> memref<1x128xf32, #tpu.memory_space<any>>
    %104 = tpu.memref_squeeze %103 : memref<1x128xf32, #tpu.memory_space<any>> -> memref<128xf32, #tpu.memory_space<any>>
    %c0_i32_55 = arith.constant 0 : i32
    %105 = tpu.memref_slice %arg5[%c5_i32_52, %c0_i32_55] : memref<8x128xf32, #tpu.memory_space<vmem>> -> memref<1x128xf32, #tpu.memory_space<vmem>>
    %106 = tpu.memref_squeeze %105 : memref<1x128xf32, #tpu.memory_space<vmem>> -> memref<128xf32, #tpu.memory_space<vmem>>
    %107 = tpu.memref_slice %arg6[%c5_i32_53] : memref<8x!tpu.dma_semaphore, #tpu.memory_space<semaphore_mem>> -> memref<1x!tpu.dma_semaphore, #tpu.memory_space<semaphore_mem>>
    %108 = tpu.memref_squeeze %107 : memref<1x!tpu.dma_semaphore, #tpu.memory_space<semaphore_mem>> -> memref<!tpu.dma_semaphore, #tpu.memory_space<semaphore_mem>>
    tpu.wait_dma2 semaphore(%108 : memref<!tpu.dma_semaphore, #tpu.memory_space<semaphore_mem>>) src(%104 : memref<128xf32, #tpu.memory_space<any>>) dst(%106 : memref<128xf32, #tpu.memory_space<vmem>>)
    %c6_i32_56 = arith.constant 6 : i32
    %c6_i32_57 = arith.constant 6 : i32
    %c0_i32_58 = arith.constant 0 : i32
    %109 = tpu.memref_slice %arg3[%57, %c0_i32_58] : memref<16x128xf32, #tpu.memory_space<any>> -> memref<1x128xf32, #tpu.memory_space<any>>
    %110 = tpu.memref_squeeze %109 : memref<1x128xf32, #tpu.memory_space<any>> -> memref<128xf32, #tpu.memory_space<any>>
    %c0_i32_59 = arith.constant 0 : i32
    %111 = tpu.memref_slice %arg5[%c6_i32_56, %c0_i32_59] : memref<8x128xf32, #tpu.memory_space<vmem>> -> memref<1x128xf32, #tpu.memory_space<vmem>>
    %112 = tpu.memref_squeeze %111 : memref<1x128xf32, #tpu.memory_space<vmem>> -> memref<128xf32, #tpu.memory_space<vmem>>
    %113 = tpu.memref_slice %arg6[%c6_i32_57] : memref<8x!tpu.dma_semaphore, #tpu.memory_space<semaphore_mem>> -> memref<1x!tpu.dma_semaphore, #tpu.memory_space<semaphore_mem>>
    %114 = tpu.memref_squeeze %113 : memref<1x!tpu.dma_semaphore, #tpu.memory_space<semaphore_mem>> -> memref<!tpu.dma_semaphore, #tpu.memory_space<semaphore_mem>>
    tpu.wait_dma2 semaphore(%114 : memref<!tpu.dma_semaphore, #tpu.memory_space<semaphore_mem>>) src(%110 : memref<128xf32, #tpu.memory_space<any>>) dst(%112 : memref<128xf32, #tpu.memory_space<vmem>>)
    %c7_i32_60 = arith.constant 7 : i32
    %c7_i32_61 = arith.constant 7 : i32
    %c0_i32_62 = arith.constant 0 : i32
    %115 = tpu.memref_slice %arg3[%66, %c0_i32_62] : memref<16x128xf32, #tpu.memory_space<any>> -> memref<1x128xf32, #tpu.memory_space<any>>
    %116 = tpu.memref_squeeze %115 : memref<1x128xf32, #tpu.memory_space<any>> -> memref<128xf32, #tpu.memory_space<any>>
    %c0_i32_63 = arith.constant 0 : i32
    %117 = tpu.memref_slice %arg5[%c7_i32_60, %c0_i32_63] : memref<8x128xf32, #tpu.memory_space<vmem>> -> memref<1x128xf32, #tpu.memory_space<vmem>>
    %118 = tpu.memref_squeeze %117 : memref<1x128xf32, #tpu.memory_space<vmem>> -> memref<128xf32, #tpu.memory_space<vmem>>
    %119 = tpu.memref_slice %arg6[%c7_i32_61] : memref<8x!tpu.dma_semaphore, #tpu.memory_space<semaphore_mem>> -> memref<1x!tpu.dma_semaphore, #tpu.memory_space<semaphore_mem>>
    %120 = tpu.memref_squeeze %119 : memref<1x!tpu.dma_semaphore, #tpu.memory_space<semaphore_mem>> -> memref<!tpu.dma_semaphore, #tpu.memory_space<semaphore_mem>>
    tpu.wait_dma2 semaphore(%120 : memref<!tpu.dma_semaphore, #tpu.memory_space<semaphore_mem>>) src(%116 : memref<128xf32, #tpu.memory_space<any>>) dst(%118 : memref<128xf32, #tpu.memory_space<vmem>>)
    %c0 = arith.constant 0 : index
    %c0_64 = arith.constant 0 : index
    %121 = vector.load %arg2[%c0, %c0_64] : memref<8x128xf32, #tpu.memory_space<vmem>>, vector<8x128xf32>
    %c0_65 = arith.constant 0 : index
    %c0_66 = arith.constant 0 : index
    %122 = vector.load %arg5[%c0_65, %c0_66] : memref<8x128xf32, #tpu.memory_space<vmem>>, vector<8x128xf32>
    %123 = arith.subf %121, %122 : vector<8x128xf32>
    %124 = arith.mulf %123, %123 : vector<8x128xf32>
    %cst = arith.constant dense<0.000000e+00> : vector<8xf32>
    %125 = vector.multi_reduction <add>, %124, %cst [1] : vector<8x128xf32> to vector<8xf32>
    %126 = vector.shape_cast %125 : vector<8xf32> to vector<8x1xf32>
    %cst_67 = arith.constant 1.000000e-10 : f32
    %cst_68 = arith.constant 1.000000e+10 : f32
    %127 = vector.broadcast %cst_67 : f32 to vector<8x1xf32>
    %128 = arith.maximumf %127, %126 : vector<8x1xf32>
    %129 = vector.broadcast %cst_68 : f32 to vector<8x1xf32>
    %130 = arith.minimumf %129, %128 : vector<8x1xf32>
    %c0_69 = arith.constant 0 : index
    %c0_70 = arith.constant 0 : index
    %131 = vector.load %arg4[%c0_69, %c0_70] : memref<8x1xf32, #tpu.memory_space<vmem>>, vector<8x1xf32>
    tpu.vector_store %arg4[%c0_69, %c0_70], %130 {strides = array<i32>} : memref<8x1xf32, #tpu.memory_space<vmem>>, vector<8x1xf32>,
    return
  }
  func.func @transform_0(%arg0: i32, %arg1: memref<8xi32, #tpu.memory_space<smem>>) -> (i32, i32) {
    %c0_i32 = arith.constant 0 : i32
    %c0_i32_0 = arith.constant 0 : i32
    return %arg0, %c0_i32 : i32, i32
  }
  func.func @transform_2(%arg0: i32, %arg1: memref<8xi32, #tpu.memory_space<smem>>) -> (i32, i32) {
    %c0_i32 = arith.constant 0 : i32
    %c0_i32_0 = arith.constant 0 : i32
    return %arg0, %c0_i32 : i32, i32
  }
}

</mosaic_0001>

<llo_original>
// kernel: tpu_custom_call.1
$region0: #{tpu_custom_call.1}
  #allocation0 [shape = 'u32[]', space=smem, size = 0x4, offset = 0x4, fixed_abs, tag = 'smem constant byte address 0x4 - core index']
  #allocation1 [shape = 'u32[72,128]{1,0:T(1,128)}', space=vmem, size = 0x9000, scoped, tag = 'internal scratch']
  #allocation2 [shape = 'f32[8,128]{1,0:T(8,128)}', space=vmem, size = 0x1000, scoped, tag = 'scratch operand']
  #allocation3 [shape = 's32[8]{0}', space=sflag, size = 0x20, scoped, tag = 'scratch operand']
  #allocation4 [shape = 's32[1]{0}', space=sflag, size = 0x4, scoped, tag = 'scoped memory for tpu_custom_call.1']
  #allocation5 [shape = 'u8[512]{0}', space=smem, size = 0x200, scoped, tag = 'prefetched SMEM operand 0']
  #allocation8 [shape = 's32[]', space=sflag, size = 0x4, offset = 0, fixed_abs, tag = 'sflag constant byte address 0x0 - dummy sync flag']
  #allocation9 [shape = 's32[]', space=sflag, size = 0x4, offset = 0, fixed_abs, tag = 'sflag constant byte address 0x0 - dummy sync flag']
  #allocation10 [shape = 'u32[]', space=smem, size = 0x4, offset = 0x44, fixed_abs, tag = 'smem constant byte address 0x44 - assertion arg 0']
  #allocation11 [shape = 'u32[]', space=smem, size = 0x4, offset = 0x48, fixed_abs, tag = 'smem constant byte address 0x48 - assertion arg 1']
  #allocation12 [shape = 's32[]', space=sflag, size = 0x4, offset = 0, fixed_abs, tag = 'sflag constant byte address 0x0 - dummy sync flag']
  #allocation13 [shape = 's32[]', space=sflag, size = 0x4, offset = 0, fixed_abs, tag = 'sflag constant byte address 0x0 - dummy sync flag']
  #allocation14 [shape = 's32[]', space=sflag, size = 0x4, offset = 0, fixed_abs, tag = 'sflag constant byte address 0x0 - dummy sync flag']
  #allocation15 [shape = 's32[]', space=sflag, size = 0x4, offset = 0, fixed_abs, tag = 'sflag constant byte address 0x0 - dummy sync flag']
  #allocation16 [shape = 's32[]', space=sflag, size = 0x4, offset = 0, fixed_abs, tag = 'sflag constant byte address 0x0 - dummy sync flag']
  #allocation17 [shape = 's32[]', space=sflag, size = 0x4, offset = 0, fixed_abs, tag = 'sflag constant byte address 0x0 - dummy sync flag']
  #allocation18 [shape = 's32[]', space=sflag, size = 0x4, offset = 0, fixed_abs, tag = 'sflag constant byte address 0x0 - dummy sync flag']
  #allocation19 [shape = 's32[]', space=sflag, size = 0x4, offset = 0, fixed_abs, tag = 'sflag constant byte address 0x0 - dummy sync flag']
  #allocation20 [shape = 's32[]', space=sflag, size = 0x4, offset = 0, fixed_abs, tag = 'sflag constant byte address 0x0 - dummy sync flag']
  #allocation21 [shape = 's32[]', space=sflag, size = 0x4, offset = 0, fixed_abs, tag = 'sflag constant byte address 0x0 - dummy sync flag']
  #allocation22 [shape = 's32[]', space=sflag, size = 0x4, offset = 0, fixed_abs, tag = 'sflag constant byte address 0x0 - dummy sync flag']
  #allocation23 [shape = 's32[]', space=sflag, size = 0x4, offset = 0, fixed_abs, tag = 'sflag constant byte address 0x0 - dummy sync flag']
  #allocation24 [shape = 's32[]', space=sflag, size = 0x4, offset = 0, fixed_abs, tag = 'sflag constant byte address 0x0 - dummy sync flag']
  #allocation25 [shape = 's32[]', space=sflag, size = 0x4, offset = 0, fixed_abs, tag = 'sflag constant byte address 0x0 - dummy sync flag']
  %s0 = inlined_call_operand.hbm [shape: s32[8], index: 0, kind: input, shape index: {}]
  %s1 = inlined_call_operand.hbm [shape: f32[8,128], index: 1, kind: input, shape index: {}]
  %s2 = inlined_call_operand.hbm [shape: f32[16,128], index: 2, kind: input, shape index: {}]
  %s3 = inlined_call_operand.vmem [shape: f32[8,1], index: 3, kind: output, shape index: {}]
  %s4 = sld [smem:[#allocation0]]
  $region50: #{tpu_custom_call.1} parent=0
    _
  %s6 = ssub.s32 1, %s4
  %s7 = scalar_select 0, %s6, %s4
  %s9 = sshll.u32 %s0, 4
  %s10 = int_to_ptr.hbm [resolvable:$true] %s9
  %12 = dma.hbm_to_smem %s10, 16, [#allocation5], [#allocation4]
  %14 = dma.done [#allocation4], 16
  %15 = sfence
  $region1: #{tpu_custom_call.1} parent=0
    #allocation6 [shape = 'u8[4096]{0}', space=vmem, size = 0x1000, scoped, tag = 'input window, operand 1, single buffered']
    #allocation7 [shape = 's32[1]{0}', space=sflag, size = 0x4, scoped, tag = 'scoped memory for tpu_custom_call.1']
    %16 = vsyncpa [#allocation7], 0
    // Predicated region
    $region2: #{tpu_custom_call.1} parent=1 // pred_check
      _
    $region3: #{tpu_custom_call.1} parent=1 // pred_check_branch
      %18 = sbr.rel (0) target = $region5
    $region4: #{tpu_custom_call.1} parent=1 // pred_region
      %20 = vsyncadd [#allocation7], 0
      %s22 = sshll.u32 %s1, 4
      %s23 = int_to_ptr.hbm [resolvable:$true] %s22
      %s24 = sshll.u32 [#allocation6], 4
      %s25 = int_to_ptr.vmem [resolvable:$true] %s24
      %27 = dma.hbm_to_vmem [thread:$0]  %s23, 128, %s25, [#allocation7]
    $region5: #{tpu_custom_call.1} parent=1 // pred_fallthru
      _
    // Predicated region
    $region6: #{tpu_custom_call.1} parent=1 // pred_check
      _
    $region7: #{tpu_custom_call.1} parent=1 // pred_check_branch
      %29 = sbr.rel (0) target = $region9
    $region8: #{tpu_custom_call.1} parent=1 // pred_region
      %31 = dma.done [#allocation7], 128
    $region9: #{tpu_custom_call.1} parent=1 // pred_fallthru
      _
    %s32 = smul.u32 0, 8
    %s33 = sld [smem:[#allocation5 + %s32]]
    %s34 = scalar_lea.hbm %s2, %s33
    // Predicated region
    $region10: #{tpu_custom_call.1} parent=1 // pred_check
      _
    $region11: #{tpu_custom_call.1} parent=1 // pred_check_branch
      %36 = sbr.rel target = $region13
    $region12: #{tpu_custom_call.1} parent=1 // pred_region
      %37 = sst [smem:[#allocation10]] [#allocation9]
      %38 = sst [smem:[#allocation11]] [#allocation8]
    $region13: #{tpu_custom_call.1} parent=1 // pred_fallthru
      _
    %40 = shalt.err (0)
    %s42 = sshll.u32 %s34, 4
    %s43 = int_to_ptr.hbm [resolvable:$true] %s42
    %s44 = sshll.u32 [#allocation2], 4
    %s45 = int_to_ptr.vmem [resolvable:$true] %s44
    %47 = dma.hbm_to_vmem [thread:$0]  %s43, 16, %s45, [#allocation3]
    %s48 = sadd.s32 %s32, 1
    %s49 = sld [smem:[#allocation5 + %s48]]
    %s50 = scalar_lea.hbm %s2, %s49
    %s51 = scalar_lea.vmem [#allocation2], 1
    %s52 = scalar_lea.sflag [#allocation3], 1
    // Predicated region
    $region14: #{tpu_custom_call.1} parent=1 // pred_check
      _
    $region15: #{tpu_custom_call.1} parent=1 // pred_check_branch
      %54 = sbr.rel target = $region17
    $region16: #{tpu_custom_call.1} parent=1 // pred_region
      %55 = sst [smem:[#allocation10]] [#allocation13]
      %56 = sst [smem:[#allocation11]] [#allocation12]
    $region17: #{tpu_custom_call.1} parent=1 // pred_fallthru
      _
    %58 = shalt.err (0)
    %s60 = sshll.u32 %s50, 4
    %s61 = int_to_ptr.hbm [resolvable:$true] %s60
    %s62 = sshll.u32 %s51, 4
    %s63 = int_to_ptr.vmem [resolvable:$true] %s62
    %65 = dma.hbm_to_vmem [thread:$0]  %s61, 16, %s63, %s52
    %s66 = sadd.s32 %s32, 2
    %s67 = sld [smem:[#allocation5 + %s66]]
    %s68 = scalar_lea.hbm %s2, %s67
    %s69 = scalar_lea.vmem [#allocation2], 2
    %s70 = scalar_lea.sflag [#allocation3], 2
    // Predicated region
    $region18: #{tpu_custom_call.1} parent=1 // pred_check
      _
    $region19: #{tpu_custom_call.1} parent=1 // pred_check_branch
      %72 = sbr.rel target = $region21
    $region20: #{tpu_custom_call.1} parent=1 // pred_region
      %73 = sst [smem:[#allocation10]] [#allocation15]
      %74 = sst [smem:[#allocation11]] [#allocation14]
    $region21: #{tpu_custom_call.1} parent=1 // pred_fallthru
      _
    %76 = shalt.err (0)
    %s78 = sshll.u32 %s68, 4
    %s79 = int_to_ptr.hbm [resolvable:$true] %s78
    %s80 = sshll.u32 %s69, 4
    %s81 = int_to_ptr.vmem [resolvable:$true] %s80
    %83 = dma.hbm_to_vmem [thread:$0]  %s79, 16, %s81, %s70
    %s84 = sadd.s32 %s32, 3
    %s85 = sld [smem:[#allocation5 + %s84]]
    %s86 = scalar_lea.hbm %s2, %s85
    %s87 = scalar_lea.vmem [#allocation2], 3
    %s88 = scalar_lea.sflag [#allocation3], 3
    // Predicated region
    $region22: #{tpu_custom_call.1} parent=1 // pred_check
      _
    $region23: #{tpu_custom_call.1} parent=1 // pred_check_branch
      %90 = sbr.rel target = $region25
    $region24: #{tpu_custom_call.1} parent=1 // pred_region
      %91 = sst [smem:[#allocation10]] [#allocation17]
      %92 = sst [smem:[#allocation11]] [#allocation16]
    $region25: #{tpu_custom_call.1} parent=1 // pred_fallthru
      _
    %94 = shalt.err (0)
    %s96 = sshll.u32 %s86, 4
    %s97 = int_to_ptr.hbm [resolvable:$true] %s96
    %s98 = sshll.u32 %s87, 4
    %s99 = int_to_ptr.vmem [resolvable:$true] %s98
    %101 = dma.hbm_to_vmem [thread:$0]  %s97, 16, %s99, %s88
    %s102 = sadd.s32 %s32, 4
    %s103 = sld [smem:[#allocation5 + %s102]]
    %s104 = scalar_lea.hbm %s2, %s103
    %s105 = scalar_lea.vmem [#allocation2], 4
    %s106 = scalar_lea.sflag [#allocation3], 4
    // Predicated region
    $region26: #{tpu_custom_call.1} parent=1 // pred_check
      _
    $region27: #{tpu_custom_call.1} parent=1 // pred_check_branch
      %108 = sbr.rel target = $region29
    $region28: #{tpu_custom_call.1} parent=1 // pred_region
      %109 = sst [smem:[#allocation10]] [#allocation19]
      %110 = sst [smem:[#allocation11]] [#allocation18]
    $region29: #{tpu_custom_call.1} parent=1 // pred_fallthru
      _
    %112 = shalt.err (0)
    %s114 = sshll.u32 %s104, 4
    %s115 = int_to_ptr.hbm [resolvable:$true] %s114
    %s116 = sshll.u32 %s105, 4
    %s117 = int_to_ptr.vmem [resolvable:$true] %s116
    %119 = dma.hbm_to_vmem [thread:$0]  %s115, 16, %s117, %s106
    %s120 = sadd.s32 %s32, 5
    %s121 = sld [smem:[#allocation5 + %s120]]
    %s122 = scalar_lea.hbm %s2, %s121
    %s123 = scalar_lea.vmem [#allocation2], 5
    %s124 = scalar_lea.sflag [#allocation3], 5
    // Predicated region
    $region30: #{tpu_custom_call.1} parent=1 // pred_check
      _
    $region31: #{tpu_custom_call.1} parent=1 // pred_check_branch
      %126 = sbr.rel target = $region33
    $region32: #{tpu_custom_call.1} parent=1 // pred_region
      %127 = sst [smem:[#allocation10]] [#allocation21]
      %128 = sst [smem:[#allocation11]] [#allocation20]
    $region33: #{tpu_custom_call.1} parent=1 // pred_fallthru
      _
    %130 = shalt.err (0)
    %s132 = sshll.u32 %s122, 4
    %s133 = int_to_ptr.hbm [resolvable:$true] %s132
    %s134 = sshll.u32 %s123, 4
    %s135 = int_to_ptr.vmem [resolvable:$true] %s134
    %137 = dma.hbm_to_vmem [thread:$0]  %s133, 16, %s135, %s124
    %s138 = sadd.s32 %s32, 6
    %s139 = sld [smem:[#allocation5 + %s138]]
    %s140 = scalar_lea.hbm %s2, %s139
    %s141 = scalar_lea.vmem [#allocation2], 6
    %s142 = scalar_lea.sflag [#allocation3], 6
    // Predicated region
    $region34: #{tpu_custom_call.1} parent=1 // pred_check
      _
    $region35: #{tpu_custom_call.1} parent=1 // pred_check_branch
      %144 = sbr.rel target = $region37
    $region36: #{tpu_custom_call.1} parent=1 // pred_region
      %145 = sst [smem:[#allocation10]] [#allocation23]
      %146 = sst [smem:[#allocation11]] [#allocation22]
    $region37: #{tpu_custom_call.1} parent=1 // pred_fallthru
      _
    %148 = shalt.err (0)
    %s150 = sshll.u32 %s140, 4
    %s151 = int_to_ptr.hbm [resolvable:$true] %s150
    %s152 = sshll.u32 %s141, 4
    %s153 = int_to_ptr.vmem [resolvable:$true] %s152
    %155 = dma.hbm_to_vmem [thread:$0]  %s151, 16, %s153, %s142
    %s156 = sadd.s32 %s32, 7
    %s157 = sld [smem:[#allocation5 + %s156]]
    %s158 = scalar_lea.hbm %s2, %s157
    %s159 = scalar_lea.vmem [#allocation2], 7
    %s160 = scalar_lea.sflag [#allocation3], 7
    // Predicated region
    $region38: #{tpu_custom_call.1} parent=1 // pred_check
      _
    $region39: #{tpu_custom_call.1} parent=1 // pred_check_branch
      %162 = sbr.rel target = $region41
    $region40: #{tpu_custom_call.1} parent=1 // pred_region
      %163 = sst [smem:[#allocation10]] [#allocation25]
      %164 = sst [smem:[#allocation11]] [#allocation24]
    $region41: #{tpu_custom_call.1} parent=1 // pred_fallthru
      _
    %166 = shalt.err (0)
    %s168 = sshll.u32 %s158, 4
    %s169 = int_to_ptr.hbm [resolvable:$true] %s168
    %s170 = sshll.u32 %s159, 4
    %s171 = int_to_ptr.vmem [resolvable:$true] %s170
    %173 = dma.hbm_to_vmem [thread:$0]  %s169, 16, %s171, %s160
    %175 = dma.done [#allocation3], 16
    %177 = dma.done %s52, 16
    %179 = dma.done %s70, 16
    %181 = dma.done %s88, 16
    %183 = dma.done %s106, 16
    %185 = dma.done %s124, 16
    %187 = dma.done %s142, 16
    %189 = dma.done %s160, 16
    %v190 = vld [vmem:[#allocation6] sm:$0xff]
    %v191 = vld [vmem:[#allocation2] sm:$0xff]
    %v192 = vsub.f32 %v190, %v191
    %v193 = vmul.f32 %v192, %v192
    %194 = vadd.xlane.f32.xlu0 %v193
    %v195 = vpop.xlane.xlu0 %194
    %v196 = vmax.f32 %v195, 1e-10
    %v197 = vmin.f32 %v196, 1e+10
    %vm198 = vcmask 7168
    %199 = vst.msk [vmem:[%s3] sm:$0xff] %vm198, %v197
    // Predicated region
    $region42: #{tpu_custom_call.1} parent=1 // pred_check
      _
    $region43: #{tpu_custom_call.1} parent=1 // pred_check_branch
      %201 = sbr.rel (0) target = $region45
    $region44: #{tpu_custom_call.1} parent=1 // pred_region
      _
    $region45: #{tpu_custom_call.1} parent=1 // pred_fallthru
      _
    // Predicated region
    $region46: #{tpu_custom_call.1} parent=1 // pred_check
      _
    $region47: #{tpu_custom_call.1} parent=1 // pred_check_branch
      %203 = sbr.rel (0) target = $region49
    $region48: #{tpu_custom_call.1} parent=1 // pred_region
      _
    $region49: #{tpu_custom_call.1} parent=1 // pred_fallthru
      _
    %204 = vsyncpa [#allocation7], 1
  %205 = vsyncmov [#allocation3]
  %s206 = vpop.sfrf %205
  %p207 = scmp.eq.s32.totalorder %s206, 0
  %p208 = pneg %p207
  %210 = shalt.err (%p208)
  %s211 = scalar_lea.sflag [#allocation3], 1
  %212 = vsyncmov %s211
  %s213 = vpop.sfrf %212
  %p214 = scmp.eq.s32.totalorder %s213, 0
  %p215 = pneg %p214
  %217 = shalt.err (%p215)
  %s218 = scalar_lea.sflag [#allocation3], 2
  %219 = vsyncmov %s218
  %s220 = vpop.sfrf %219
  %p221 = scmp.eq.s32.totalorder %s220, 0
  %p222 = pneg %p221
  %224 = shalt.err (%p222)
  %s225 = scalar_lea.sflag [#allocation3], 3
  %226 = vsyncmov %s225
  %s227 = vpop.sfrf %226
  %p228 = scmp.eq.s32.totalorder %s227, 0
  %p229 = pneg %p228
  %231 = shalt.err (%p229)
  %s232 = scalar_lea.sflag [#allocation3], 4
  %233 = vsyncmov %s232
  %s234 = vpop.sfrf %233
  %p235 = scmp.eq.s32.totalorder %s234, 0
  %p236 = pneg %p235
  %238 = shalt.err (%p236)
  %s239 = scalar_lea.sflag [#allocation3], 5
  %240 = vsyncmov %s239
  %s241 = vpop.sfrf %240
  %p242 = scmp.eq.s32.totalorder %s241, 0
  %p243 = pneg %p242
  %245 = shalt.err (%p243)
  %s246 = scalar_lea.sflag [#allocation3], 6
  %247 = vsyncmov %s246
  %s248 = vpop.sfrf %247
  %p249 = scmp.eq.s32.totalorder %s248, 0
  %p250 = pneg %p249
  %252 = shalt.err (%p250)
  %s253 = scalar_lea.sflag [#allocation3], 7
  %254 = vsyncmov %s253
  %s255 = vpop.sfrf %254
  %p256 = scmp.eq.s32.totalorder %s255, 0
  %p257 = pneg %p256
  %259 = shalt.err (%p257)

</llo_original>
